<compile_context>
chip_gen: v7x
topology: tpu7x:2x2x1
jax: 0.10.0
libtpu: 0.0.40
codegen_flags: <defaults>
</compile_context>

<pallas_src>
import functools

import jax
import jax.numpy as jnp
from jax.experimental import pallas as pl
from jax.experimental.pallas import tpu as pltpu

TM_MAX = 512  # max row tile for the row-tiled GEMM kernel (multiple of 8)


def _round_up(x, m):
    return ((x + m - 1) // m) * m


# ----------------------------------------------------------- in-kernel math --

def _elu(v):
    # exp argument clamped to <= 0 so the not-selected branch never overflows.
    return jnp.where(v > 0, v, jnp.exp(jnp.minimum(v, 0.0)) - 1.0)


def _concat_elu(v):
    return jnp.concatenate([_elu(v), _elu(-v)], axis=-1)


# tap enumeration (dy-major) matches the (kh*kw, 2F, out) weight packing below
TAPS_DOWN = tuple((dy, dx) for dy in range(2) for dx in range(3))       # (2,3)
TAPS_DOWNRIGHT = tuple((dy, dx) for dy in range(2) for dx in range(2))  # (2,2)


def _gated_resnet_block(og4, a_ce, pad_scr, taps,
                        w_in, b_in, w_skip, b_skip, w_out, b_out, H, W, F):
    """One gated_resnet on a (1,H,W,F) block, everything resident in VMEM.

    og4    : (1,H,W,F) f32 value
    a_ce   : concat_elu of the skip input, (H*W, 2*Fa) value, or None
    pad_scr: (1,H+1,W+2,2F) VMEM scratch; border is zero on entry and stays
             zero (only the interior [1:1+H, 1:1+W] is ever written).
    Returns (H*W, F) f32.
    """
    M = H * W
    og2 = og4.reshape(M, F)

    # ---- conv_input(concat_elu(og)): shifted-tap accumulation, no im2col ----
    pad_scr[:, 1:1 + H, 1:1 + W, :] = _concat_elu(og4)
    x1 = jnp.zeros((M, F), jnp.float32)
    for t, (dy, dx) in enumerate(taps):
        win = pad_scr[:, dy:dy + H, dx:dx + W, :].reshape(M, 2 * F)
        x1 = x1 + jnp.dot(win.astype(jnp.bfloat16), w_in[t],
                          preferred_element_type=jnp.float32)
    x1 = x1 + b_in[...]

    # ---- optional skip connection: nin(concat_elu(a)) -----------------------
    if a_ce is not None:
        x1 = x1 + jnp.dot(a_ce.astype(jnp.bfloat16), w_skip[...],
                          preferred_element_type=jnp.float32)
        x1 = x1 + b_skip[...]

    # ---- conv_out(concat_elu(x1)) --------------------------------------------
    # TODO(synk): nn.Dropout2d(0.5) skipped — eval-mode (identity) semantics.
    pad_scr[:, 1:1 + H, 1:1 + W, :] = _concat_elu(x1).reshape(1, H, W, 2 * F)
    c = jnp.zeros((M, 2 * F), jnp.float32)
    for t, (dy, dx) in enumerate(taps):
        win = pad_scr[:, dy:dy + H, dx:dx + W, :].reshape(M, 2 * F)
        c = c + jnp.dot(win.astype(jnp.bfloat16), w_out[t],
                        preferred_element_type=jnp.float32)
    c = c + b_out[...]

    # ---- gate: og + a * sigmoid(b) -------------------------------------------
    return og2 + c[:, :F] * jax.nn.sigmoid(c[:, F:])


# --------------------------------------------- fused (u, ul) resnet kernels --

@functools.lru_cache(maxsize=None)
def _up_pair_call(B, H, W, F):
    """u = gr_down(u); ul = gr_downright(ul, a=u)  — fused in one kernel."""

    def kernel(u_ref, ul_ref,
               wu_in, bu_in, wu_out, bu_out,
               wl_in, bl_in, wl_skip, bl_skip, wl_out, bl_out,
               uo_ref, ulo_ref, pad_scr):
        pad_scr[...] = jnp.zeros_like(pad_scr)   # border stays zero afterwards

        u_out = _gated_resnet_block(u_ref[...], None, pad_scr, TAPS_DOWN,
                                    wu_in, bu_in, None, None, wu_out, bu_out,
                                    H, W, F)
        uo_ref[...] = u_out.reshape(1, H, W, F)

        a_ce = _concat_elu(u_out)                         # skip = fresh u
        ul_out = _gated_resnet_block(ul_ref[...], a_ce, pad_scr,
                                     TAPS_DOWNRIGHT,
                                     wl_in, bl_in, wl_skip, bl_skip,
                                     wl_out, bl_out, H, W, F)
        ulo_ref[...] = ul_out.reshape(1, H, W, F)

    img = pl.BlockSpec((1, H, W, F), lambda b: (b, 0, 0, 0))
    w6 = lambda n: pl.BlockSpec((6, 2 * F, n), lambda b: (0, 0, 0))
    w4 = lambda n: pl.BlockSpec((4, 2 * F, n), lambda b: (0, 0, 0))
    vec = lambda n: pl.BlockSpec((1, n), lambda b: (0, 0))

    call = pl.pallas_call(
        kernel,
        out_shape=(jax.ShapeDtypeStruct((B, H, W, F), jnp.float32),
                   jax.ShapeDtypeStruct((B, H, W, F), jnp.float32)),
        grid=(B,),
        in_specs=[img, img,
                  w6(F), vec(F), w6(2 * F), vec(2 * F),
                  w4(F), vec(F),
                  pl.BlockSpec((2 * F, F), lambda b: (0, 0)), vec(F),
                  w4(2 * F), vec(2 * F)],
        out_specs=(img, img),
        scratch_shapes=[pltpu.VMEM((1, H + 1, W + 2, 2 * F), jnp.float32)],
        compiler_params=pltpu.CompilerParams(
            dimension_semantics=("parallel",)),
    )
    return jax.jit(call)


@functools.lru_cache(maxsize=None)
def _down_pair_call(B, H, W, F):
    """u = gr_down(u, a=a_u); ul = gr_downright(ul, a=cat([u, a_ul])) fused."""
    M = H * W

    def kernel(u_ref, ul_ref, au_ref, al_ref,
               wu_in, bu_in, wu_skip, bu_skip, wu_out, bu_out,
               wl_in, bl_in, wl_skip, bl_skip, wl_out, bl_out,
               uo_ref, ulo_ref, pad_scr):
        pad_scr[...] = jnp.zeros_like(pad_scr)

        au_ce = _concat_elu(au_ref[...].reshape(M, F))            # (M, 2F)
        u_out = _gated_resnet_block(u_ref[...], au_ce, pad_scr, TAPS_DOWN,
                                    wu_in, bu_in, wu_skip, bu_skip,
                                    wu_out, bu_out, H, W, F)
        uo_ref[...] = u_out.reshape(1, H, W, F)

        # ul-stream skip = concat_elu(cat([fresh u, popped ul]))   (M, 4F)
        a = jnp.concatenate([u_out, al_ref[...].reshape(M, F)], axis=-1)
        al_ce = _concat_elu(a)
        ul_out = _gated_resnet_block(ul_ref[...], al_ce, pad_scr,
                                     TAPS_DOWNRIGHT,
                                     wl_in, bl_in, wl_skip, bl_skip,
                                     wl_out, bl_out, H, W, F)
        ulo_ref[...] = ul_out.reshape(1, H, W, F)

    img = pl.BlockSpec((1, H, W, F), lambda b: (b, 0, 0, 0))
    w6 = lambda n: pl.BlockSpec((6, 2 * F, n), lambda b: (0, 0, 0))
    w4 = lambda n: pl.BlockSpec((4, 2 * F, n), lambda b: (0, 0, 0))
    vec = lambda n: pl.BlockSpec((1, n), lambda b: (0, 0))

    call = pl.pallas_call(
        kernel,
        out_shape=(jax.ShapeDtypeStruct((B, H, W, F), jnp.float32),
                   jax.ShapeDtypeStruct((B, H, W, F), jnp.float32)),
        grid=(B,),
        in_specs=[img, img, img, img,
                  w6(F), vec(F),
                  pl.BlockSpec((2 * F, F), lambda b: (0, 0)), vec(F),
                  w6(2 * F), vec(2 * F),
                  w4(F), vec(F),
                  pl.BlockSpec((4 * F, F), lambda b: (0, 0)), vec(F),
                  w4(2 * F), vec(2 * F)],
        out_specs=(img, img),
        scratch_shapes=[pltpu.VMEM((1, H + 1, W + 2, 2 * F), jnp.float32)],
        compiler_params=pltpu.CompilerParams(
            dimension_semantics=("parallel",)),
    )
    return jax.jit(call)


def gated_resnet_pair_up(u, ul, p_u, p_ul):
    B, H, W, F = u.shape
    return _up_pair_call(B, H, W, F)(
        u, ul,
        p_u['w_in'], p_u['b_in'], p_u['w_out'], p_u['b_out'],
        p_ul['w_in'], p_ul['b_in'], p_ul['w_skip'], p_ul['b_skip'],
        p_ul['w_out'], p_ul['b_out'])


def gated_resnet_pair_down(u, ul, a_u, a_ul, p_u, p_ul):
    B, H, W, F = u.shape
    return _down_pair_call(B, H, W, F)(
        u, ul, a_u, a_ul,
        p_u['w_in'], p_u['b_in'], p_u['w_skip'], p_u['b_skip'],
        p_u['w_out'], p_u['b_out'],
        p_ul['w_in'], p_ul['b_in'], p_ul['w_skip'], p_ul['b_skip'],
        p_ul['w_out'], p_ul['b_out'])


# ------------------------------------------- row-tiled GEMM (+bias, +elu) ----

@functools.lru_cache(maxsize=None)
def _matmul_bias_call(Mp, K, N, tm, act):
    def kernel(x_ref, w_ref, b_ref, o_ref):
        x = x_ref[...]
        if act == "elu":
            x = _elu(x)
        o_ref[...] = (jnp.dot(x.astype(jnp.bfloat16), w_ref[...],
                              preferred_element_type=jnp.float32)
                      + b_ref[...])

    call = pl.pallas_call(
        kernel,
        out_shape=jax.ShapeDtypeStruct((Mp, N), jnp.float32),
        grid=(Mp // tm,),
        in_specs=[pl.BlockSpec((tm, K), lambda i: (i, 0)),
                  pl.BlockSpec((K, N), lambda i: (0, 0)),
                  pl.BlockSpec((1, N), lambda i: (0, 0))],
        out_specs=pl.BlockSpec((tm, N), lambda i: (i, 0)),
        compiler_params=pltpu.CompilerParams(
            dimension_semantics=("parallel",)),
    )
    return jax.jit(call)


def matmul_bias(x, w_bf16, b, act=None):
    """(M, K) @ (K, N) + (N,), bf16 MXU operands, f32 accumulation."""
    x = x.astype(jnp.float32)
    M, K = x.shape
    N = w_bf16.shape[1]
    # adaptive row tile: as large as possible (<= TM_MAX) with minimal padding
    ntiles = -(-M // TM_MAX)
    tm = _round_up(-(-M // ntiles), 8)
    Mp = tm * ntiles
    if Mp != M:
        x = jnp.pad(x, ((0, Mp - M), (0, 0)))
    out = _matmul_bias_call(Mp, K, N, tm, act)(
        x, w_bf16, b.reshape(1, N).astype(jnp.float32))
    return out[:M]


# ------------------------------------------------------ conv / deconv glue ---

def down_shift(x):
    return jnp.pad(x[:, :-1, :, :], ((0, 0), (1, 0), (0, 0), (0, 0)))


def right_shift(x):
    return jnp.pad(x[:, :, :-1, :], ((0, 0), (0, 0), (1, 0), (0, 0)))


def conv2d_im2col(x, wm, b, kh, kw, pad_lrtb=(0, 0, 0, 0), stride=(1, 1)):
    """Explicit zero pad (l, r, t, b) then valid conv: JAX im2col + Pallas GEMM.

    Only used for the few non-resnet convs (init / strided downsize / deconv);
    the hot-path resnet convs accumulate taps inside the fused pair kernels."""
    l, r, t, bo = pad_lrtb
    xp = jnp.pad(x, ((0, 0), (t, bo), (l, r), (0, 0)))
    sh, sw = stride
    B, Hp, Wp, Cin = xp.shape
    Hout = (Hp - kh) // sh + 1
    Wout = (Wp - kw) // sw + 1
    patches = []
    for dy in range(kh):
        for dx in range(kw):
            patches.append(xp[:, dy:dy + (Hout - 1) * sh + 1:sh,
                               dx:dx + (Wout - 1) * sw + 1:sw, :])
    pat = jnp.concatenate(patches, axis=-1).reshape(B * Hout * Wout,
                                                    kh * kw * Cin)
    out = matmul_bias(pat, wm, b)
    return out.reshape(B, Hout, Wout, -1)


def down_shifted_conv2d(x, p, kh, kw, stride=(1, 1), shift_output_down=False):
    out = conv2d_im2col(x, p['wm'], p['b'], kh, kw,
                        ((kw - 1) // 2, (kw - 1) // 2, kh - 1, 0), stride)
    return down_shift(out) if shift_output_down else out


def down_right_shifted_conv2d(x, p, kh, kw, stride=(1, 1),
                              shift_output_right=False):
    out = conv2d_im2col(x, p['wm'], p['b'], kh, kw,
                        (kw - 1, 0, kh - 1, 0), stride)
    return right_shift(out) if shift_output_right else out


def deconv2d(x, wm_flipped, b, kh, kw, stride=(2, 2), output_padding=1):
    """ConvTranspose2d(padding=0) via zero-dilation + full pad + valid conv
    with the spatially-flipped kernel.
    TODO(synk): phase (sub-pixel) decomposition would avoid the ~4x
    multiply-by-zero work; left as-is since deconvs are a tiny FLOP fraction."""
    sh, sw = stride
    B, H, W, Cin = x.shape
    Hd, Wd = (H - 1) * sh + 1, (W - 1) * sw + 1
    xd = jnp.zeros((B, Hd, Wd, Cin), x.dtype).at[:, ::sh, ::sw, :].set(x)
    xd = jnp.pad(xd, ((0, 0), (kh - 1, kh - 1 + output_padding),
                      (kw - 1, kw - 1 + output_padding), (0, 0)))
    return conv2d_im2col(xd, wm_flipped, b, kh, kw)


def down_shifted_deconv2d(x, p, kh, kw, stride=(2, 2)):
    out = deconv2d(x, p['wm'], p['b'], kh, kw, stride, 1)
    H, W = out.shape[1], out.shape[2]
    return out[:, :H - kh + 1, (kw - 1) // 2: W - (kw - 1) // 2, :]


def down_right_shifted_deconv2d(x, p, kh, kw, stride=(2, 2)):
    out = deconv2d(x, p['wm'], p['b'], kh, kw, stride, 1)
    H, W = out.shape[1], out.shape[2]
    return out[:, :H - kh + 1, :W - kw + 1, :]


# ------------------------------------------------------------------ params ---

def init_params(key, nr_resnet, nr_filters, nr_logistic_mix, input_channels,
                num_classes, embedding_dim):
    ctr = [0]

    def nxt():
        ctr[0] += 1
        return jax.random.fold_in(key, ctr[0])

    def W(*shape, scale=0.05):
        return (scale * jax.random.normal(nxt(), shape)).astype(jnp.float32)

    F = nr_filters

    # Weights are packaged once here in the exact layout/dtype the kernels
    # consume (bf16 matmul operands, tap-major for the fused resnet kernels),
    # so no per-call casts/reshapes are paid at runtime.
    def conv_p(kh, kw, cin, cout):
        w = W(kh, kw, cin, cout)
        return {'wm': w.reshape(kh * kw * cin, cout).astype(jnp.bfloat16),
                'b': W(cout)}

    def deconv_p(kh, kw, cin, cout):
        w = W(kh, kw, cin, cout)[::-1, ::-1, :, :]     # spatially flipped
        return {'wm': w.reshape(kh * kw * cin, cout).astype(jnp.bfloat16),
                'b': W(cout)}

    def gr(kh, kw, skip):
        p = {'w_in': W(kh, kw, 2 * F, F)
                 .reshape(kh * kw, 2 * F, F).astype(jnp.bfloat16),
             'b_in': W(F).reshape(1, F),
             'w_out': W(kh, kw, 2 * F, 2 * F)
                 .reshape(kh * kw, 2 * F, 2 * F).astype(jnp.bfloat16),
             'b_out': W(2 * F).reshape(1, 2 * F)}
        if skip:
            p['w_skip'] = W(2 * skip * F, F).astype(jnp.bfloat16)
            p['b_skip'] = W(F).reshape(1, F)
        return p

    down_nr = [nr_resnet, nr_resnet + 1, nr_resnet + 1]
    num_mix = 3 if input_channels == 1 else 10
    # NOTE: weight_norm wrappers of the reference are identity at default init,
    # so plain weight tensors reproduce the same functional form.
    return {
        'u_init': conv_p(2, 3, input_channels + 1, F),
        'ul_init0': conv_p(1, 3, input_channels + 1, F),
        'ul_init1': conv_p(2, 1, input_channels + 1, F),
        'up_layers': [{'u': [gr(2, 3, 0) for _ in range(nr_resnet)],
                       'ul': [gr(2, 2, 1) for _ in range(nr_resnet)]}
                      for _ in range(3)],
        'down_layers': [{'u': [gr(2, 3, 1) for _ in range(down_nr[i])],
                         'ul': [gr(2, 2, 2) for _ in range(down_nr[i])]}
                        for i in range(3)],
        'downsize_u': [conv_p(2, 3, F, F) for _ in range(2)],
        'downsize_ul': [conv_p(2, 2, F, F) for _ in range(2)],
        'upsize_u': [deconv_p(2, 3, F, F) for _ in range(2)],
        'upsize_ul': [deconv_p(2, 2, F, F) for _ in range(2)],
        'nin_out': {'wm': W(F, num_mix * nr_logistic_mix).astype(jnp.bfloat16),
                    'b': W(num_mix * nr_logistic_mix)},
        'emb': W(num_classes, 3 * 32 * 32),
        'emb_u_up': W(num_classes, F * 32 * 32),
        'emb_ul_up': W(num_classes, F * 32 * 32),
        'emb_u_down': W(num_classes, F * 8 * 8),
        'emb_ul_down': W(num_classes, F * 8 * 8),
        'emb_u': W(num_classes, embedding_dim),
        'emb_ul': W(num_classes, embedding_dim),
    }


# ----------------------------------------------------------------- forward ---

def pixelcnn_forward(params, x_nchw, labels, nr_resnet, nr_filters):
    F = nr_filters
    B = x_nchw.shape[0]
    x = jnp.transpose(x_nchw, (0, 2, 3, 1)).astype(jnp.float32)  # -> NHWC

    def emb_nhwc(table, C, H, W):
        # reproduces torch: weight[labels].view(B, C, H, W) (channel-major flat)
        e = table[labels].reshape(B, C, H, W)
        return jnp.transpose(e, (0, 2, 3, 1))

    # class-conditional additive embedding on the image
    x = x + emb_nhwc(params['emb'], 3, 32, 32)

    # init_padding: ones channel appended
    pad = jnp.ones((B, x.shape[1], x.shape[2], 1), jnp.float32)
    x = jnp.concatenate([x, pad], axis=-1)

    u_list = [down_shifted_conv2d(x, params['u_init'], 2, 3,
                                  shift_output_down=True)
              + emb_nhwc(params['emb_u_up'], F, 32, 32)]
    ul_list = [down_shifted_conv2d(x, params['ul_init0'], 1, 3,
                                   shift_output_down=True)
               + down_right_shifted_conv2d(x, params['ul_init1'], 2, 1,
                                           shift_output_right=True)
               + emb_nhwc(params['emb_ul_up'], F, 32, 32)]

    # ------------------------------ up pass ------------------------------
    for i in range(3):
        lp = params['up_layers'][i]
        u, ul = u_list[-1], ul_list[-1]
        for j in range(nr_resnet):
            u, ul = gated_resnet_pair_up(u, ul, lp['u'][j], lp['ul'][j])
            u_list.append(u)
            ul_list.append(ul)
        if i != 2:
            u_list.append(down_shifted_conv2d(u_list[-1],
                                              params['downsize_u'][i],
                                              2, 3, stride=(2, 2)))
            ul_list.append(down_right_shifted_conv2d(ul_list[-1],
                                                     params['downsize_ul'][i],
                                                     2, 2, stride=(2, 2)))

    # ----------------------------- down pass -----------------------------
    u = u_list.pop() + emb_nhwc(params['emb_u_down'], F, 8, 8)
    ul = ul_list.pop() + emb_nhwc(params['emb_ul_down'], F, 8, 8)
    down_nr = [nr_resnet, nr_resnet + 1, nr_resnet + 1]
    for i in range(3):
        lp = params['down_layers'][i]
        for j in range(down_nr[i]):
            u, ul = gated_resnet_pair_down(u, ul, u_list.pop(), ul_list.pop(),
                                           lp['u'][j], lp['ul'][j])
        if i != 2:
            u = down_shifted_deconv2d(u, params['upsize_u'][i], 2, 3)
            ul = down_right_shifted_deconv2d(ul, params['upsize_ul'][i], 2, 2)

    assert len(u_list) == 0 and len(ul_list) == 0

    # final nin with the ELU fused into the GEMM kernel
    emb_ul_final = emb_nhwc(params['emb_ul'], 1, 32, 32)  # broadcasts over C
    z = (ul + emb_ul_final).reshape(B * 32 * 32, F)
    x_out = matmul_bias(z, params['nin_out']['wm'], params['nin_out']['b'],
                        act="elu")
    x_out = x_out.reshape(B, 32, 32, -1)
    return jnp.transpose(x_out, (0, 3, 1, 2))  # back to NCHW


# -------------------------------------------------------------------- main ---

if __name__ == "__main__":
    # small config (spatial is fixed at 32x32 by the module's embedding views)
    nr_resnet = 1
    nr_filters = 32
    nr_logistic_mix = 2
    input_channels = 3
    num_classes = 4
    embedding_dim = 32 * 32
    B = 2

    key = jax.random.PRNGKey(0)
    pkey, xkey = jax.random.split(key)
    params = init_params(pkey, nr_resnet, nr_filters, nr_logistic_mix,
                         input_channels, num_classes, embedding_dim)
    x = jax.random.normal(xkey, (B, input_channels, 32, 32), jnp.float32)
    labels = jnp.array([0, 1], dtype=jnp.int32)

    out = pixelcnn_forward(params, x, labels, nr_resnet, nr_filters)
    out = jax.block_until_ready(out)

    num_mix = 3 if input_channels == 1 else 10
    assert out.shape == (B, num_mix * nr_logistic_mix, 32, 32), out.shape
    assert bool(jnp.all(jnp.isfinite(out)))
    print("KERNEL_OK")
</pallas_src>

<mosaic_0001>
module attributes {stable_mosaic.version = 11 : i64} {
  func.func @kernel(%arg0: i32, %arg1: memref<512x24xf32, #tpu.memory_space<vmem>>, %arg2: memref<24x32xbf16, #tpu.memory_space<vmem>>, %arg3: memref<1x32xf32, #tpu.memory_space<vmem>>, %arg4: memref<512x32xf32, #tpu.memory_space<vmem>>) attributes {dimension_semantics = [#tpu.dimension_semantics<parallel>], iteration_bounds = array<i64: 4>, scalar_prefetch = 0 : i64, scratch_operands = 0 : i64, tpu.core_type = #tpu.core_type<tc>, window_params = [{transform_indices = @transform_0, window_bounds = array<i64: 512, 24>}, {pipeline_mode = #tpu.pipeline_mode<synchronous>, transform_indices = @transform_1, window_bounds = array<i64: 24, 32>}, {pipeline_mode = #tpu.pipeline_mode<synchronous>, transform_indices = @transform_2, window_bounds = array<i64: 1, 32>}, {transform_indices = @transform_3, window_bounds = array<i64: 512, 32>}]} {
    %c0 = arith.constant 0 : index
    %c0_0 = arith.constant 0 : index
    %0 = vector.load %arg1[%c0, %c0_0] : memref<512x24xf32, #tpu.memory_space<vmem>>, vector<512x24xf32>
    %1 = arith.truncf %0 : vector<512x24xf32> to vector<512x24xbf16>
    %c0_1 = arith.constant 0 : index
    %c0_2 = arith.constant 0 : index
    %2 = vector.load %arg2[%c0_1, %c0_2] : memref<24x32xbf16, #tpu.memory_space<vmem>>, vector<24x32xbf16>
    %cst = arith.constant dense<0.000000e+00> : vector<512x32xf32>
    %3 = tpu.matmul %1, %2, %cst {dimension_numbers = #tpu.dot_dimension_numbers<[1], [0], [0], [1], [0, 0, 1, 1], [], []>} : vector<512x24xbf16>, vector<24x32xbf16>, vector<512x32xf32> -> vector<512x32xf32>
    %c0_3 = arith.constant 0 : index
    %c0_4 = arith.constant 0 : index
    %4 = vector.load %arg3[%c0_3, %c0_4] : memref<1x32xf32, #tpu.memory_space<vmem>>, vector<1x32xf32>
    %5 = vector.broadcast %4 : vector<1x32xf32> to vector<512x32xf32>
    %6 = arith.addf %3, %5 : vector<512x32xf32>
    %c0_5 = arith.constant 0 : index
    %c0_6 = arith.constant 0 : index
    %7 = vector.load %arg4[%c0_5, %c0_6] : memref<512x32xf32, #tpu.memory_space<vmem>>, vector<512x32xf32>
    tpu.vector_store %arg4[%c0_5, %c0_6], %6 {strides = array<i32>} : memref<512x32xf32, #tpu.memory_space<vmem>>, vector<512x32xf32>,
    return
  }
  func.func @transform_0(%arg0: i32) -> (i32, i32) {
    %c0_i32 = arith.constant 0 : i32
    %c0_i32_0 = arith.constant 0 : i32
    return %arg0, %c0_i32 : i32, i32
  }
  func.func @transform_1(%arg0: i32) -> (i32, i32) {
    %c0_i32 = arith.constant 0 : i32
    %c0_i32_0 = arith.constant 0 : i32
    %c0_i32_1 = arith.constant 0 : i32
    return %c0_i32, %c0_i32_0 : i32, i32
  }
  func.func @transform_2(%arg0: i32) -> (i32, i32) {
    %c0_i32 = arith.constant 0 : i32
    %c0_i32_0 = arith.constant 0 : i32
    %c0_i32_1 = arith.constant 0 : i32
    return %c0_i32, %c0_i32_0 : i32, i32
  }
  func.func @transform_3(%arg0: i32) -> (i32, i32) {
    %c0_i32 = arith.constant 0 : i32
    %c0_i32_0 = arith.constant 0 : i32
    return %arg0, %c0_i32 : i32, i32
  }
}

</mosaic_0001>

<llo_original>
// kernel: tpu_custom_call.1
$region0: #{tpu_custom_call.1}
  #allocation0 [shape = 'u32[]', space=smem, size = 0x4, offset = 0x4, fixed_abs, tag = 'smem constant byte address 0x4 - core index']
  #allocation1 [shape = 'u32[144,128]{1,0:T(1,128)}', space=vmem, size = 0x12000, scoped, tag = 'internal scratch']
  %s0 = inlined_call_operand.vmem [shape: f32[2048,24], index: 0, kind: input, shape index: {}]
  %s1 = inlined_call_operand.vmem [shape: bf16[24,32], index: 1, kind: input, shape index: {}]
  %s2 = inlined_call_operand.vmem [shape: f32[1,32], index: 2, kind: input, shape index: {}]
  %s3 = inlined_call_operand.vmem [shape: f32[2048,32], index: 3, kind: output, shape index: {}]
  %s4 = sld [smem:[#allocation0]]
  $region45: #{tpu_custom_call.1} parent=0
    _
  %s6 = ssub.s32 1, %s4
  %s7 = scalar_select 0, %s6, %s4
  loop: start=0, step=1, limit=6
  $region2: #{tpu_custom_call.1} parent=0 // loop_pre_header
    _
  $region3: #{tpu_custom_call.1} parent=0 // loop_header
    %s9 = sphi 0, %s13
    %p10 = scmp.ge.s32.totalorder %s9, 6
    %s19 = sphi 0, %s21
    %s22 = sphi 0, %s19
    %s23 = sphi 0, %s22
    %s39 = sphi 0, %s23
    %s43 = sphi 0, %s43
    %s45 = sphi 0, %s43
    %s46 = sphi 0, %s45
    %s60 = sphi 0, %s46
    %s64 = sphi 0, %s64
    %s66 = sphi 0, %s64
    %s67 = sphi 0, %s66
    %s81 = sphi 0, %s67
    %s87 = sphi 0, %s89
    %s90 = sphi 0, %s87
    %s91 = sphi 0, %s90
    %s107 = sphi 0, %s91
  $region4: #{tpu_custom_call.1} parent=0 // loop_header_branch
    %12 = sbr.rel (%p10) target = $region8
  $region5: #{tpu_custom_call.1} parent=0 // loop_body
    %s14 = ssub.s32 %s9, 1
    %s15 = ssub.s32 %s9, 2
    %s16 = sadd.s32 %s9, 1
    %s17 = ssub.s32 %s9, %s16
    %p18 = scmp.eq.s32.totalorder %s17, 0
    %s20 = sadd.s32 %s19, 1
    %s21 = scalar_select %p18, %s19, %s20
    %p24 = pneg %p18
    %p25 = scmp.eq.s32.totalorder %s9, 3
    %p26 = por %p24, %p25
    %p27 = scmp.ne.s32.totalorder %s19, %s22
    %p28 = scmp.eq.s32.totalorder %s9, 0
    %p29 = por %p27, %p28
    %p30 = scmp.ne.s32.totalorder %s19, %s22
    %p31 = scmp.eq.s32.totalorder %s14, 3
    %p32 = por %p30, %p31
    %p33 = scmp.ne.s32.totalorder %s22, %s23
    %p34 = scmp.eq.s32.totalorder %s14, 0
    %p35 = por %p33, %p34
    %p36 = scmp.ne.s32.totalorder %s22, %s23
    %p37 = scmp.eq.s32.totalorder %s15, 3
    %p38 = por %p36, %p37
    %p40 = scmp.ne.s32.totalorder %s23, %s39
    %p41 = scmp.eq.s32.totalorder %s15, 0
    %p42 = por %p40, %p41
    %s44 = sadd.s32 %s43, 1
    %p47 = scmp.eq.s32.totalorder %s9, 3
    %p48 = scmp.ne.s32.totalorder %s43, %s45
    %p49 = scmp.eq.s32.totalorder %s9, 0
    %p50 = por %p48, %p49
    %p51 = scmp.ne.s32.totalorder %s43, %s45
    %p52 = scmp.eq.s32.totalorder %s14, 3
    %p53 = por %p51, %p52
    %p54 = scmp.ne.s32.totalorder %s45, %s46
    %p55 = scmp.eq.s32.totalorder %s14, 0
    %p56 = por %p54, %p55
    %p57 = scmp.ne.s32.totalorder %s45, %s46
    %p58 = scmp.eq.s32.totalorder %s15, 3
    %p59 = por %p57, %p58
    %p61 = scmp.ne.s32.totalorder %s46, %s60
    %p62 = scmp.eq.s32.totalorder %s15, 0
    %p63 = por %p61, %p62
    %s65 = sadd.s32 %s64, 1
    %p68 = scmp.eq.s32.totalorder %s9, 3
    %p69 = scmp.ne.s32.totalorder %s64, %s66
    %p70 = scmp.eq.s32.totalorder %s9, 0
    %p71 = por %p69, %p70
    %p72 = scmp.ne.s32.totalorder %s64, %s66
    %p73 = scmp.eq.s32.totalorder %s14, 3
    %p74 = por %p72, %p73
    %p75 = scmp.ne.s32.totalorder %s66, %s67
    %p76 = scmp.eq.s32.totalorder %s14, 0
    %p77 = por %p75, %p76
    %p78 = scmp.ne.s32.totalorder %s66, %s67
    %p79 = scmp.eq.s32.totalorder %s15, 3
    %p80 = por %p78, %p79
    %p82 = scmp.ne.s32.totalorder %s67, %s81
    %p83 = scmp.eq.s32.totalorder %s15, 0
    %p84 = por %p82, %p83
    %s85 = ssub.s32 %s9, %s16
    %p86 = scmp.eq.s32.totalorder %s85, 0
    %s88 = sadd.s32 %s87, 1
    %s89 = scalar_select %p86, %s87, %s88
    %p92 = pneg %p86
    %p93 = scmp.eq.s32.totalorder %s9, 3
    %p94 = por %p92, %p93
    %p95 = scmp.ne.s32.totalorder %s87, %s90
    %p96 = scmp.eq.s32.totalorder %s9, 0
    %p97 = por %p95, %p96
    %p98 = scmp.ne.s32.totalorder %s87, %s90
    %p99 = scmp.eq.s32.totalorder %s14, 3
    %p100 = por %p98, %p99
    %p101 = scmp.ne.s32.totalorder %s90, %s91
    %p102 = scmp.eq.s32.totalorder %s14, 0
    %p103 = por %p101, %p102
    %p104 = scmp.ne.s32.totalorder %s90, %s91
    %p105 = scmp.eq.s32.totalorder %s15, 3
    %p106 = por %p104, %p105
    %p108 = scmp.ne.s32.totalorder %s91, %s107
    %p109 = scmp.eq.s32.totalorder %s15, 0
    %p110 = por %p108, %p109
    %p111 = scmp.le.s32.totalorder 1, %s9
    %p112 = scmp.lt.s32.totalorder %s9, 5
    %p113 = pnand %p111, %p112
    %p114 = pneg %p113
    // Predicated region
    $region9: #{tpu_custom_call.1} parent=5 // pred_check
      _
    $region10: #{tpu_custom_call.1} parent=5 // pred_check_branch
      %116 = sbr.rel (%p113) target = $region12
    $region11: #{tpu_custom_call.1} parent=5 // pred_region
      %s117 = ssub.s32 %s9, 1
      // Predicated region
      $region13: #{tpu_custom_call.1} parent=11 // pred_check
        %p118 = pneg %p56
      $region14: #{tpu_custom_call.1} parent=11 // pred_check_branch
        %120 = sbr.rel (%p118) target = $region16
      $region15: #{tpu_custom_call.1} parent=11 // pred_region
        _
      $region16: #{tpu_custom_call.1} parent=11 // pred_fallthru
        _
      // Predicated region
      $region17: #{tpu_custom_call.1} parent=11 // pred_check
        %p121 = pneg %p77
      $region18: #{tpu_custom_call.1} parent=11 // pred_check_branch
        %123 = sbr.rel (%p121) target = $region20
      $region19: #{tpu_custom_call.1} parent=11 // pred_region
        _
      $region20: #{tpu_custom_call.1} parent=11 // pred_fallthru
        _
    $region12: #{tpu_custom_call.1} parent=5 // pred_fallthru
      _
    %p124 = scmp.lt.s32.totalorder %s9, 4
    // Predicated region
    $region21: #{tpu_custom_call.1} parent=5 // pred_check
      %p125 = pneg %p124
    $region22: #{tpu_custom_call.1} parent=5 // pred_check_branch
      %127 = sbr.rel (%p125) target = $region24
    $region23: #{tpu_custom_call.1} parent=5 // pred_region
      // Predicated region
      $region25: #{tpu_custom_call.1} parent=23 // pred_check
        %p128 = pneg %p29
      $region26: #{tpu_custom_call.1} parent=23 // pred_check_branch
        %130 = sbr.rel (%p128) target = $region28
      $region27: #{tpu_custom_call.1} parent=23 // pred_region
        %s131 = smul.u32 64, %s9
        %p132 = scmp.lt.s32.totalorder %s131, 255
        %s133 = scalar_select %p132, %s131, 255
        %s134 = smul.addr %s133, 8
        %s135 = scalar_lea.vmem %s0, %s134
        %s136 = smul.u32 64, %s9
      $region28: #{tpu_custom_call.1} parent=23 // pred_fallthru
        _
    $region24: #{tpu_custom_call.1} parent=5 // pred_fallthru
      _
    %p137 = scmp.le.s32.totalorder 1, %s9
    %p138 = scmp.lt.s32.totalorder %s9, 5
    %p139 = pnand %p137, %p138
    %p140 = pneg %p139
    // Predicated region
    $region29: #{tpu_custom_call.1} parent=5 // pred_check
      _
    $region30: #{tpu_custom_call.1} parent=5 // pred_check_branch
      %142 = sbr.rel (%p139) target = $region32
    $region31: #{tpu_custom_call.1} parent=5 // pred_region
      %s143 = ssub.s32 %s9, 1
      %s144 = smul.u32 64, %s14
      %p145 = scmp.lt.s32.totalorder %s144, 255
      %s146 = scalar_select %p145, %s144, 255
      %s147 = smul.addr %s146, 8
      %s148 = scalar_lea.vmem %s0, %s147
      %p149 = pneg %p35
      %p150 = pneg %p32
      %p151 = pneg %p56
      %p152 = pneg %p53
      %p153 = pneg %p77
      %p154 = pneg %p74
      %p155 = pneg %p103
      %p156 = pneg %p100
      %s157 = smul.u32 64, %s14
      %p158 = scmp.lt.s32.totalorder %s157, 255
      %s159 = scalar_select %p158, %s157, 255
      %s160 = smul.addr %s159, 8
      %s161 = scalar_lea.vmem %s3, %s160
      %s162 = smul.u32 64, %s14
      %p163 = scmp.lt.s32.totalorder %s162, 255
      %s164 = scalar_select %p163, %s162, 255
      %s165 = smul.addr %s164, 8
      %s166 = scalar_lea.vmem %s0, %s165
      %s167 = smul.u32 64, %s14
      %s168 = smul.u32 64, %s14
      %p169 = scmp.lt.s32.totalorder %s168, 255
      %s170 = scalar_select %p169, %s168, 255
      %s171 = smul.addr %s170, 8
      %s172 = scalar_lea.vmem %s3, %s171
      %s173 = smul.u32 64, %s14
      %v175 = vld [vmem:[%s166] sm:$0xff]
      %v176 = vld [vmem:[%s166 + $0x8] sm:$0xff]
      %v177 = vld [vmem:[%s166 + $0x10] sm:$0xff]
      %v178 = vld [vmem:[%s166 + $0x18] sm:$0xff]
      %v179 = vld [vmem:[%s166 + $0x20] sm:$0xff]
      %v180 = vld [vmem:[%s166 + $0x28] sm:$0xff]
      %v181 = vld [vmem:[%s166 + $0x30] sm:$0xff]
      %v182 = vld [vmem:[%s166 + $0x38] sm:$0xff]
      %v183 = vld [vmem:[%s166 + $0x40] sm:$0xff]
      %v184 = vld [vmem:[%s166 + $0x48] sm:$0xff]
      %v185 = vld [vmem:[%s166 + $0x50] sm:$0xff]
      %v186 = vld [vmem:[%s166 + $0x58] sm:$0xff]
      %v187 = vld [vmem:[%s166 + $0x60] sm:$0xff]
      %v188 = vld [vmem:[%s166 + $0x68] sm:$0xff]
      %v189 = vld [vmem:[%s166 + $0x70] sm:$0xff]
      %v190 = vld [vmem:[%s166 + $0x78] sm:$0xff]
      %v191 = vld [vmem:[%s166 + $0x80] sm:$0xff]
      %v192 = vld [vmem:[%s166 + $0x88] sm:$0xff]
      %v193 = vld [vmem:[%s166 + $0x90] sm:$0xff]
      %v194 = vld [vmem:[%s166 + $0x98] sm:$0xff]
      %v195 = vld [vmem:[%s166 + $0xa0] sm:$0xff]
      %v196 = vld [vmem:[%s166 + $0xa8] sm:$0xff]
      %v197 = vld [vmem:[%s166 + $0xb0] sm:$0xff]
      %v198 = vld [vmem:[%s166 + $0xb8] sm:$0xff]
      %v199 = vld [vmem:[%s166 + $0xc0] sm:$0xff]
      %v200 = vld [vmem:[%s166 + $0xc8] sm:$0xff]
      %v201 = vld [vmem:[%s166 + $0xd0] sm:$0xff]
      %v202 = vld [vmem:[%s166 + $0xd8] sm:$0xff]
      %v203 = vld [vmem:[%s166 + $0xe0] sm:$0xff]
      %v204 = vld [vmem:[%s166 + $0xe8] sm:$0xff]
      %v205 = vld [vmem:[%s166 + $0xf0] sm:$0xff]
      %v206 = vld [vmem:[%s166 + $0xf8] sm:$0xff]
      %v207 = vld [vmem:[%s166 + $0x100] sm:$0xff]
      %v208 = vld [vmem:[%s166 + $0x108] sm:$0xff]
      %v209 = vld [vmem:[%s166 + $0x110] sm:$0xff]
      %v210 = vld [vmem:[%s166 + $0x118] sm:$0xff]
      %v211 = vld [vmem:[%s166 + $0x120] sm:$0xff]
      %v212 = vld [vmem:[%s166 + $0x128] sm:$0xff]
      %v213 = vld [vmem:[%s166 + $0x130] sm:$0xff]
      %v214 = vld [vmem:[%s166 + $0x138] sm:$0xff]
      %v215 = vld [vmem:[%s166 + $0x140] sm:$0xff]
      %v216 = vld [vmem:[%s166 + $0x148] sm:$0xff]
      %v217 = vld [vmem:[%s166 + $0x150] sm:$0xff]
      %v218 = vld [vmem:[%s166 + $0x158] sm:$0xff]
      %v219 = vld [vmem:[%s166 + $0x160] sm:$0xff]
      %v220 = vld [vmem:[%s166 + $0x168] sm:$0xff]
      %v221 = vld [vmem:[%s166 + $0x170] sm:$0xff]
      %v222 = vld [vmem:[%s166 + $0x178] sm:$0xff]
      %v223 = vld [vmem:[%s166 + $0x180] sm:$0xff]
      %v224 = vld [vmem:[%s166 + $0x188] sm:$0xff]
      %v225 = vld [vmem:[%s166 + $0x190] sm:$0xff]
      %v226 = vld [vmem:[%s166 + $0x198] sm:$0xff]
      %v227 = vld [vmem:[%s166 + $0x1a0] sm:$0xff]
      %v228 = vld [vmem:[%s166 + $0x1a8] sm:$0xff]
      %v229 = vld [vmem:[%s166 + $0x1b0] sm:$0xff]
      %v230 = vld [vmem:[%s166 + $0x1b8] sm:$0xff]
      %v231 = vld [vmem:[%s166 + $0x1c0] sm:$0xff]
      %v232 = vld [vmem:[%s166 + $0x1c8] sm:$0xff]
      %v233 = vld [vmem:[%s166 + $0x1d0] sm:$0xff]
      %v234 = vld [vmem:[%s166 + $0x1d8] sm:$0xff]
      %v235 = vld [vmem:[%s166 + $0x1e0] sm:$0xff]
      %v236 = vld [vmem:[%s166 + $0x1e8] sm:$0xff]
      %v237 = vld [vmem:[%s166 + $0x1f0] sm:$0xff]
      %v238 = vld [vmem:[%s166 + $0x1f8] sm:$0xff]
      %v239 = vpack.c.bf16 %v176, %v175
      %v240 = vpack.c.bf16 %v178, %v177
      %v241 = vpack.c.bf16 %v180, %v179
      %v242 = vpack.c.bf16 %v182, %v181
      %v243 = vpack.c.bf16 %v184, %v183
      %v244 = vpack.c.bf16 %v186, %v185
      %v245 = vpack.c.bf16 %v188, %v187
      %v246 = vpack.c.bf16 %v190, %v189
      %v247 = vpack.c.bf16 %v192, %v191
      %v248 = vpack.c.bf16 %v194, %v193
      %v249 = vpack.c.bf16 %v196, %v195
      %v250 = vpack.c.bf16 %v198, %v197
      %v251 = vpack.c.bf16 %v200, %v199
      %v252 = vpack.c.bf16 %v202, %v201
      %v253 = vpack.c.bf16 %v204, %v203
      %v254 = vpack.c.bf16 %v206, %v205
      %v255 = vpack.c.bf16 %v208, %v207
      %v256 = vpack.c.bf16 %v210, %v209
      %v257 = vpack.c.bf16 %v212, %v211
      %v258 = vpack.c.bf16 %v214, %v213
      %v259 = vpack.c.bf16 %v216, %v215
      %v260 = vpack.c.bf16 %v218, %v217
      %v261 = vpack.c.bf16 %v220, %v219
      %v262 = vpack.c.bf16 %v222, %v221
      %v263 = vpack.c.bf16 %v224, %v223
      %v264 = vpack.c.bf16 %v226, %v225
      %v265 = vpack.c.bf16 %v228, %v227
      %v266 = vpack.c.bf16 %v230, %v229
      %v267 = vpack.c.bf16 %v232, %v231
      %v268 = vpack.c.bf16 %v234, %v233
      %v269 = vpack.c.bf16 %v236, %v235
      %v270 = vpack.c.bf16 %v238, %v237
      %v271 = vld [vmem:[%s1] sm:$0xf]
      %v272 = vld [vmem:[%s1 + $0x4] sm:$0xf]
      %v273 = vld [vmem:[%s1 + $0x8] sm:$0xf]
      %v274 = vld [vmem:[%s2] sm:$0x1]
      %v276 = vlaneseq
      %v277 = vshrl.u32 %v276, 7
      %v278 = vsub.s32 0, %v277
      %v279 = vrot.slane %v274, %v278
      %v284 = vunpack.c.l.b16 %v271
      %v285 = vunpack.c.l.b16 %v272
      %v286 = vunpack.c.l.b16 %v273
      %v287 = vpack.c.b16 %v285, %v284
      %v288 = vpack.c.b16 %v286, %v286
      %vm290 = vcmask 195584
      %v292 = vsel %vm290, %v239, 0
      %v295 = vsel %vm290, %v240, 0
      %v298 = vsel %vm290, %v241, 0
      %v301 = vsel %vm290, %v242, 0
      %v304 = vsel %vm290, %v243, 0
      %v307 = vsel %vm290, %v244, 0
      %v310 = vsel %vm290, %v245, 0
      %v313 = vsel %vm290, %v246, 0
      %v316 = vsel %vm290, %v247, 0
      %v319 = vsel %vm290, %v248, 0
      %v322 = vsel %vm290, %v249, 0
      %v325 = vsel %vm290, %v250, 0
      %v328 = vsel %vm290, %v251, 0
      %v331 = vsel %vm290, %v252, 0
      %v334 = vsel %vm290, %v253, 0
      %v337 = vsel %vm290, %v254, 0
      %v340 = vsel %vm290, %v255, 0
      %v343 = vsel %vm290, %v256, 0
      %v346 = vsel %vm290, %v257, 0
      %v349 = vsel %vm290, %v258, 0
      %v352 = vsel %vm290, %v259, 0
      %v355 = vsel %vm290, %v260, 0
      %v358 = vsel %vm290, %v261, 0
      %v361 = vsel %vm290, %v262, 0
      %v364 = vsel %vm290, %v263, 0
      %v367 = vsel %vm290, %v264, 0
      %v370 = vsel %vm290, %v265, 0
      %v373 = vsel %vm290, %v266, 0
      %v376 = vsel %vm290, %v267, 0
      %v379 = vsel %vm290, %v268, 0
      %v382 = vsel %vm290, %v269, 0
      %v385 = vsel %vm290, %v270, 0
      %vm387 = vcmask 1043456
      %v389 = vsel %vm387, %v288, 0
      %391 = vmatprep.subr.bf16.mxu0 0
      %392 = vmatpush1.bf16.msra.mxu0 %v287
      %393 = vmatprep.subr.bf16.mxu0 0
      %394 = vmatpush1.bf16.msra.mxu0 %v389
      %395 = vmatprep.subr.bf16.mxu0 0
      %396 = vmatpush1.bf16.msra.mxu0 0
      %397 = vmatprep.subr.bf16.mxu0 0
      %398 = vmatpush1.bf16.msra.mxu0 0
      %399 = vmatprep.subr.bf16.mxu0 0
      %400 = vmatpush1.bf16.msra.mxu0 0
      %401 = vmatprep.subr.bf16.mxu0 0
      %402 = vmatpush1.bf16.msra.mxu0 0
      %403 = vmatprep.subr.bf16.mxu0 0
      %404 = vmatpush1.bf16.msra.mxu0 0
      %405 = vmatprep.subr.bf16.mxu0 0
      %406 = vmatpush1.bf16.msra.mxu0 0
      %407 = vmatprep.subr.bf16.mxu0 0
      %408 = vmatpush1.bf16.msra.mxu0 0
      %409 = vmatprep.subr.bf16.mxu0 0
      %410 = vmatpush1.bf16.msra.mxu0 0
      %411 = vmatprep.subr.bf16.mxu0 0
      %412 = vmatpush1.bf16.msra.mxu0 0
      %413 = vmatprep.subr.bf16.mxu0 0
      %414 = vmatpush1.bf16.msra.mxu0 0
      %415 = vmatprep.subr.bf16.mxu0 0
      %416 = vmatpush1.bf16.msra.mxu0 0
      %417 = vmatprep.subr.bf16.mxu0 0
      %418 = vmatpush1.bf16.msra.mxu0 0
      %419 = vmatprep.subr.bf16.mxu0 0
      %420 = vmatpush1.bf16.msra.mxu0 0
      %421 = vmatprep.subr.bf16.mxu0 0
      %422 = vmatpush1.bf16.msra.mxu0 0
      %423 = vmatprep.mubr.bf16.mxu0 0
      %424 = vmatmul.mubr.bf16.gmra.mrb[0].mxu0 %v292
      %v425 = vpop.f32.mrb[0].mxu0
      %v426 = vadd.f32 %v279, %v425
      %v427 = vpop.f32.mrb[0].mxu0
      %v428 = vpop.f32.mrb[0].mxu0
      %v429 = vadd.f32 %v279, %v428
      %v430 = vpop.f32.mrb[0].mxu0
      %431 = vmatprep.mubr.bf16.mxu0 0
      %432 = vmatmul.mubr.bf16.gmra.mrb[0].mxu0 %v295
      %v433 = vpop.f32.mrb[0].mxu0
      %v434 = vadd.f32 %v279, %v433
      %v435 = vpop.f32.mrb[0].mxu0
      %v436 = vpop.f32.mrb[0].mxu0
      %v437 = vadd.f32 %v279, %v436
      %v438 = vpop.f32.mrb[0].mxu0
      %439 = vmatprep.mubr.bf16.mxu0 0
      %440 = vmatmul.mubr.bf16.gmra.mrb[0].mxu0 %v298
      %v441 = vpop.f32.mrb[0].mxu0
      %v442 = vadd.f32 %v279, %v441
      %v443 = vpop.f32.mrb[0].mxu0
      %v444 = vpop.f32.mrb[0].mxu0
      %v445 = vadd.f32 %v279, %v444
      %v446 = vpop.f32.mrb[0].mxu0
      %447 = vmatprep.mubr.bf16.mxu0 0
      %448 = vmatmul.mubr.bf16.gmra.mrb[0].mxu0 %v301
      %v449 = vpop.f32.mrb[0].mxu0
      %v450 = vadd.f32 %v279, %v449
      %v451 = vpop.f32.mrb[0].mxu0
      %v452 = vpop.f32.mrb[0].mxu0
      %v453 = vadd.f32 %v279, %v452
      %v454 = vpop.f32.mrb[0].mxu0
      %455 = vmatprep.mubr.bf16.mxu0 0
      %456 = vmatmul.mubr.bf16.gmra.mrb[0].mxu0 %v304
      %v457 = vpop.f32.mrb[0].mxu0
      %v458 = vadd.f32 %v279, %v457
      %v459 = vpop.f32.mrb[0].mxu0
      %v460 = vpop.f32.mrb[0].mxu0
      %v461 = vadd.f32 %v279, %v460
      %v462 = vpop.f32.mrb[0].mxu0
      %463 = vmatprep.mubr.bf16.mxu0 0
      %464 = vmatmul.mubr.bf16.gmra.mrb[0].mxu0 %v307
      %v465 = vpop.f32.mrb[0].mxu0
      %v466 = vadd.f32 %v279, %v465
      %v467 = vpop.f32.mrb[0].mxu0
      %v468 = vpop.f32.mrb[0].mxu0
      %v469 = vadd.f32 %v279, %v468
      %v470 = vpop.f32.mrb[0].mxu0
      %471 = vmatprep.mubr.bf16.mxu0 0
      %472 = vmatmul.mubr.bf16.gmra.mrb[0].mxu0 %v310
      %v473 = vpop.f32.mrb[0].mxu0
      %v474 = vadd.f32 %v279, %v473
      %v475 = vpop.f32.mrb[0].mxu0
      %v476 = vpop.f32.mrb[0].mxu0
      %v477 = vadd.f32 %v279, %v476
      %v478 = vpop.f32.mrb[0].mxu0
      %479 = vmatprep.mubr.bf16.mxu0 0
      %480 = vmatmul.mubr.bf16.gmra.mrb[0].mxu0 %v313
      %v481 = vpop.f32.mrb[0].mxu0
      %v482 = vadd.f32 %v279, %v481
      %v483 = vpop.f32.mrb[0].mxu0
      %v484 = vpop.f32.mrb[0].mxu0
      %v485 = vadd.f32 %v279, %v484
      %v486 = vpop.f32.mrb[0].mxu0
      %487 = vmatprep.mubr.bf16.mxu0 0
      %488 = vmatmul.mubr.bf16.gmra.mrb[0].mxu0 %v316
      %v489 = vpop.f32.mrb[0].mxu0
      %v490 = vadd.f32 %v279, %v489
      %v491 = vpop.f32.mrb[0].mxu0
      %v492 = vpop.f32.mrb[0].mxu0
      %v493 = vadd.f32 %v279, %v492
      %v494 = vpop.f32.mrb[0].mxu0
      %495 = vmatprep.mubr.bf16.mxu0 0
      %496 = vmatmul.mubr.bf16.gmra.mrb[0].mxu0 %v319
      %v497 = vpop.f32.mrb[0].mxu0
      %v498 = vadd.f32 %v279, %v497
      %v499 = vpop.f32.mrb[0].mxu0
      %v500 = vpop.f32.mrb[0].mxu0
      %v501 = vadd.f32 %v279, %v500
      %v502 = vpop.f32.mrb[0].mxu0
      %503 = vmatprep.mubr.bf16.mxu0 0
      %504 = vmatmul.mubr.bf16.gmra.mrb[0].mxu0 %v322
      %v505 = vpop.f32.mrb[0].mxu0
      %v506 = vadd.f32 %v279, %v505
      %v507 = vpop.f32.mrb[0].mxu0
      %v508 = vpop.f32.mrb[0].mxu0
      %v509 = vadd.f32 %v279, %v508
      %v510 = vpop.f32.mrb[0].mxu0
      %511 = vmatprep.mubr.bf16.mxu0 0
      %512 = vmatmul.mubr.bf16.gmra.mrb[0].mxu0 %v325
      %v513 = vpop.f32.mrb[0].mxu0
      %v514 = vadd.f32 %v279, %v513
      %v515 = vpop.f32.mrb[0].mxu0
      %v516 = vpop.f32.mrb[0].mxu0
      %v517 = vadd.f32 %v279, %v516
      %v518 = vpop.f32.mrb[0].mxu0
      %519 = vmatprep.mubr.bf16.mxu0 0
      %520 = vmatmul.mubr.bf16.gmra.mrb[0].mxu0 %v328
      %v521 = vpop.f32.mrb[0].mxu0
      %v522 = vadd.f32 %v279, %v521
      %v523 = vpop.f32.mrb[0].mxu0
      %v524 = vpop.f32.mrb[0].mxu0
      %v525 = vadd.f32 %v279, %v524
      %v526 = vpop.f32.mrb[0].mxu0
      %527 = vmatprep.mubr.bf16.mxu0 0
      %528 = vmatmul.mubr.bf16.gmra.mrb[0].mxu0 %v331
      %v529 = vpop.f32.mrb[0].mxu0
      %v530 = vadd.f32 %v279, %v529
      %v531 = vpop.f32.mrb[0].mxu0
      %v532 = vpop.f32.mrb[0].mxu0
      %v533 = vadd.f32 %v279, %v532
      %v534 = vpop.f32.mrb[0].mxu0
      %535 = vmatprep.mubr.bf16.mxu0 0
      %536 = vmatmul.mubr.bf16.gmra.mrb[0].mxu0 %v334
      %v537 = vpop.f32.mrb[0].mxu0
      %v538 = vadd.f32 %v279, %v537
      %v539 = vpop.f32.mrb[0].mxu0
      %v540 = vpop.f32.mrb[0].mxu0
      %v541 = vadd.f32 %v279, %v540
      %v542 = vpop.f32.mrb[0].mxu0
      %543 = vmatprep.mubr.bf16.mxu0 0
      %544 = vmatmul.mubr.bf16.gmra.mrb[0].mxu0 %v337
      %v545 = vpop.f32.mrb[0].mxu0
      %v546 = vadd.f32 %v279, %v545
      %v547 = vpop.f32.mrb[0].mxu0
      %v548 = vpop.f32.mrb[0].mxu0
      %v549 = vadd.f32 %v279, %v548
      %v550 = vpop.f32.mrb[0].mxu0
      %551 = vmatprep.mubr.bf16.mxu0 0
      %552 = vmatmul.mubr.bf16.gmra.mrb[0].mxu0 %v340
      %v553 = vpop.f32.mrb[0].mxu0
      %v554 = vadd.f32 %v279, %v553
      %v555 = vpop.f32.mrb[0].mxu0
      %v556 = vpop.f32.mrb[0].mxu0
      %v557 = vadd.f32 %v279, %v556
      %v558 = vpop.f32.mrb[0].mxu0
      %559 = vmatprep.mubr.bf16.mxu0 0
      %560 = vmatmul.mubr.bf16.gmra.mrb[0].mxu0 %v343
      %v561 = vpop.f32.mrb[0].mxu0
      %v562 = vadd.f32 %v279, %v561
      %v563 = vpop.f32.mrb[0].mxu0
      %v564 = vpop.f32.mrb[0].mxu0
      %v565 = vadd.f32 %v279, %v564
      %v566 = vpop.f32.mrb[0].mxu0
      %567 = vmatprep.mubr.bf16.mxu0 0
      %568 = vmatmul.mubr.bf16.gmra.mrb[0].mxu0 %v346
      %v569 = vpop.f32.mrb[0].mxu0
      %v570 = vadd.f32 %v279, %v569
      %v571 = vpop.f32.mrb[0].mxu0
      %v572 = vpop.f32.mrb[0].mxu0
      %v573 = vadd.f32 %v279, %v572
      %v574 = vpop.f32.mrb[0].mxu0
      %575 = vmatprep.mubr.bf16.mxu0 0
      %576 = vmatmul.mubr.bf16.gmra.mrb[0].mxu0 %v349
      %v577 = vpop.f32.mrb[0].mxu0
      %v578 = vadd.f32 %v279, %v577
      %v579 = vpop.f32.mrb[0].mxu0
      %v580 = vpop.f32.mrb[0].mxu0
      %v581 = vadd.f32 %v279, %v580
      %v582 = vpop.f32.mrb[0].mxu0
      %583 = vmatprep.mubr.bf16.mxu0 0
      %584 = vmatmul.mubr.bf16.gmra.mrb[0].mxu0 %v352
      %v585 = vpop.f32.mrb[0].mxu0
      %v586 = vadd.f32 %v279, %v585
      %v587 = vpop.f32.mrb[0].mxu0
      %v588 = vpop.f32.mrb[0].mxu0
      %v589 = vadd.f32 %v279, %v588
      %v590 = vpop.f32.mrb[0].mxu0
      %591 = vmatprep.mubr.bf16.mxu0 0
      %592 = vmatmul.mubr.bf16.gmra.mrb[0].mxu0 %v355
      %v593 = vpop.f32.mrb[0].mxu0
      %v594 = vadd.f32 %v279, %v593
      %v595 = vpop.f32.mrb[0].mxu0
      %v596 = vpop.f32.mrb[0].mxu0
      %v597 = vadd.f32 %v279, %v596
      %v598 = vpop.f32.mrb[0].mxu0
      %599 = vmatprep.mubr.bf16.mxu0 0
      %600 = vmatmul.mubr.bf16.gmra.mrb[0].mxu0 %v358
      %v601 = vpop.f32.mrb[0].mxu0
      %v602 = vadd.f32 %v279, %v601
      %v603 = vpop.f32.mrb[0].mxu0
      %v604 = vpop.f32.mrb[0].mxu0
      %v605 = vadd.f32 %v279, %v604
      %v606 = vpop.f32.mrb[0].mxu0
      %607 = vmatprep.mubr.bf16.mxu0 0
      %608 = vmatmul.mubr.bf16.gmra.mrb[0].mxu0 %v361
      %v609 = vpop.f32.mrb[0].mxu0
      %v610 = vadd.f32 %v279, %v609
      %v611 = vpop.f32.mrb[0].mxu0
      %v612 = vpop.f32.mrb[0].mxu0
      %v613 = vadd.f32 %v279, %v612
      %v614 = vpop.f32.mrb[0].mxu0
      %615 = vmatprep.mubr.bf16.mxu0 0
      %616 = vmatmul.mubr.bf16.gmra.mrb[0].mxu0 %v364
      %v617 = vpop.f32.mrb[0].mxu0
      %v618 = vadd.f32 %v279, %v617
      %v619 = vpop.f32.mrb[0].mxu0
      %v620 = vpop.f32.mrb[0].mxu0
      %v621 = vadd.f32 %v279, %v620
      %v622 = vpop.f32.mrb[0].mxu0
      %623 = vmatprep.mubr.bf16.mxu0 0
      %624 = vmatmul.mubr.bf16.gmra.mrb[0].mxu0 %v367
      %v625 = vpop.f32.mrb[0].mxu0
      %v626 = vadd.f32 %v279, %v625
      %v627 = vpop.f32.mrb[0].mxu0
      %v628 = vpop.f32.mrb[0].mxu0
      %v629 = vadd.f32 %v279, %v628
      %v630 = vpop.f32.mrb[0].mxu0
      %631 = vmatprep.mubr.bf16.mxu0 0
      %632 = vmatmul.mubr.bf16.gmra.mrb[0].mxu0 %v370
      %v633 = vpop.f32.mrb[0].mxu0
      %v634 = vadd.f32 %v279, %v633
      %v635 = vpop.f32.mrb[0].mxu0
      %v636 = vpop.f32.mrb[0].mxu0
      %v637 = vadd.f32 %v279, %v636
      %v638 = vpop.f32.mrb[0].mxu0
      %639 = vmatprep.mubr.bf16.mxu0 0
      %640 = vmatmul.mubr.bf16.gmra.mrb[0].mxu0 %v373
      %v641 = vpop.f32.mrb[0].mxu0
      %v642 = vadd.f32 %v279, %v641
      %v643 = vpop.f32.mrb[0].mxu0
      %v644 = vpop.f32.mrb[0].mxu0
      %v645 = vadd.f32 %v279, %v644
      %v646 = vpop.f32.mrb[0].mxu0
      %647 = vmatprep.mubr.bf16.mxu0 0
      %648 = vmatmul.mubr.bf16.gmra.mrb[0].mxu0 %v376
      %v649 = vpop.f32.mrb[0].mxu0
      %v650 = vadd.f32 %v279, %v649
      %v651 = vpop.f32.mrb[0].mxu0
      %v652 = vpop.f32.mrb[0].mxu0
      %v653 = vadd.f32 %v279, %v652
      %v654 = vpop.f32.mrb[0].mxu0
      %655 = vmatprep.mubr.bf16.mxu0 0
      %656 = vmatmul.mubr.bf16.gmra.mrb[0].mxu0 %v379
      %v657 = vpop.f32.mrb[0].mxu0
      %v658 = vadd.f32 %v279, %v657
      %v659 = vpop.f32.mrb[0].mxu0
      %v660 = vpop.f32.mrb[0].mxu0
      %v661 = vadd.f32 %v279, %v660
      %v662 = vpop.f32.mrb[0].mxu0
      %663 = vmatprep.mubr.bf16.mxu0 0
      %664 = vmatmul.mubr.bf16.gmra.mrb[0].mxu0 %v382
      %v665 = vpop.f32.mrb[0].mxu0
      %v666 = vadd.f32 %v279, %v665
      %v667 = vpop.f32.mrb[0].mxu0
      %v668 = vpop.f32.mrb[0].mxu0
      %v669 = vadd.f32 %v279, %v668
      %v670 = vpop.f32.mrb[0].mxu0
      %671 = vmatprep.mubr.bf16.mxu0 0
      %672 = vmatmul.mubr.bf16.gmra.mrb[0].mxu0 %v385
      %v673 = vpop.f32.mrb[0].mxu0
      %v674 = vadd.f32 %v279, %v673
      %v675 = vpop.f32.mrb[0].mxu0
      %v676 = vpop.f32.mrb[0].mxu0
      %v677 = vadd.f32 %v279, %v676
      %v678 = vpop.f32.mrb[0].mxu0
      %679 = vdwg.mxu0
      %vm680 = vcmask 261120
      %681 = vst.msk [vmem:[%s172] sm:$0xff] %vm680, %v426
      %682 = vst.msk [vmem:[%s172 + $0x8] sm:$0xff] %vm680, %v429
      %683 = vst.msk [vmem:[%s172 + $0x10] sm:$0xff] %vm680, %v434
      %684 = vst.msk [vmem:[%s172 + $0x18] sm:$0xff] %vm680, %v437
      %685 = vst.msk [vmem:[%s172 + $0x20] sm:$0xff] %vm680, %v442
      %686 = vst.msk [vmem:[%s172 + $0x28] sm:$0xff] %vm680, %v445
      %687 = vst.msk [vmem:[%s172 + $0x30] sm:$0xff] %vm680, %v450
      %688 = vst.msk [vmem:[%s172 + $0x38] sm:$0xff] %vm680, %v453
      %689 = vst.msk [vmem:[%s172 + $0x40] sm:$0xff] %vm680, %v458
      %690 = vst.msk [vmem:[%s172 + $0x48] sm:$0xff] %vm680, %v461
      %691 = vst.msk [vmem:[%s172 + $0x50] sm:$0xff] %vm680, %v466
      %692 = vst.msk [vmem:[%s172 + $0x58] sm:$0xff] %vm680, %v469
      %693 = vst.msk [vmem:[%s172 + $0x60] sm:$0xff] %vm680, %v474
      %694 = vst.msk [vmem:[%s172 + $0x68] sm:$0xff] %vm680, %v477
      %695 = vst.msk [vmem:[%s172 + $0x70] sm:$0xff] %vm680, %v482
      %696 = vst.msk [vmem:[%s172 + $0x78] sm:$0xff] %vm680, %v485
      %697 = vst.msk [vmem:[%s172 + $0x80] sm:$0xff] %vm680, %v490
      %698 = vst.msk [vmem:[%s172 + $0x88] sm:$0xff] %vm680, %v493
      %699 = vst.msk [vmem:[%s172 + $0x90] sm:$0xff] %vm680, %v498
      %700 = vst.msk [vmem:[%s172 + $0x98] sm:$0xff] %vm680, %v501
      %701 = vst.msk [vmem:[%s172 + $0xa0] sm:$0xff] %vm680, %v506
      %702 = vst.msk [vmem:[%s172 + $0xa8] sm:$0xff] %vm680, %v509
      %703 = vst.msk [vmem:[%s172 + $0xb0] sm:$0xff] %vm680, %v514
      %704 = vst.msk [vmem:[%s172 + $0xb8] sm:$0xff] %vm680, %v517
      %705 = vst.msk [vmem:[%s172 + $0xc0] sm:$0xff] %vm680, %v522
      %706 = vst.msk [vmem:[%s172 + $0xc8] sm:$0xff] %vm680, %v525
      %707 = vst.msk [vmem:[%s172 + $0xd0] sm:$0xff] %vm680, %v530
      %708 = vst.msk [vmem:[%s172 + $0xd8] sm:$0xff] %vm680, %v533
      %709 = vst.msk [vmem:[%s172 + $0xe0] sm:$0xff] %vm680, %v538
      %710 = vst.msk [vmem:[%s172 + $0xe8] sm:$0xff] %vm680, %v541
      %711 = vst.msk [vmem:[%s172 + $0xf0] sm:$0xff] %vm680, %v546
      %712 = vst.msk [vmem:[%s172 + $0xf8] sm:$0xff] %vm680, %v549
      %713 = vst.msk [vmem:[%s172 + $0x100] sm:$0xff] %vm680, %v554
      %714 = vst.msk [vmem:[%s172 + $0x108] sm:$0xff] %vm680, %v557
      %715 = vst.msk [vmem:[%s172 + $0x110] sm:$0xff] %vm680, %v562
      %716 = vst.msk [vmem:[%s172 + $0x118] sm:$0xff] %vm680, %v565
      %717 = vst.msk [vmem:[%s172 + $0x120] sm:$0xff] %vm680, %v570
      %718 = vst.msk [vmem:[%s172 + $0x128] sm:$0xff] %vm680, %v573
      %719 = vst.msk [vmem:[%s172 + $0x130] sm:$0xff] %vm680, %v578
      %720 = vst.msk [vmem:[%s172 + $0x138] sm:$0xff] %vm680, %v581
      %721 = vst.msk [vmem:[%s172 + $0x140] sm:$0xff] %vm680, %v586
      %722 = vst.msk [vmem:[%s172 + $0x148] sm:$0xff] %vm680, %v589
      %723 = vst.msk [vmem:[%s172 + $0x150] sm:$0xff] %vm680, %v594
      %724 = vst.msk [vmem:[%s172 + $0x158] sm:$0xff] %vm680, %v597
      %725 = vst.msk [vmem:[%s172 + $0x160] sm:$0xff] %vm680, %v602
      %726 = vst.msk [vmem:[%s172 + $0x168] sm:$0xff] %vm680, %v605
      %727 = vst.msk [vmem:[%s172 + $0x170] sm:$0xff] %vm680, %v610
      %728 = vst.msk [vmem:[%s172 + $0x178] sm:$0xff] %vm680, %v613
      %729 = vst.msk [vmem:[%s172 + $0x180] sm:$0xff] %vm680, %v618
      %730 = vst.msk [vmem:[%s172 + $0x188] sm:$0xff] %vm680, %v621
      %731 = vst.msk [vmem:[%s172 + $0x190] sm:$0xff] %vm680, %v626
      %732 = vst.msk [vmem:[%s172 + $0x198] sm:$0xff] %vm680, %v629
      %733 = vst.msk [vmem:[%s172 + $0x1a0] sm:$0xff] %vm680, %v634
      %734 = vst.msk [vmem:[%s172 + $0x1a8] sm:$0xff] %vm680, %v637
      %735 = vst.msk [vmem:[%s172 + $0x1b0] sm:$0xff] %vm680, %v642
      %736 = vst.msk [vmem:[%s172 + $0x1b8] sm:$0xff] %vm680, %v645
      %737 = vst.msk [vmem:[%s172 + $0x1c0] sm:$0xff] %vm680, %v650
      %738 = vst.msk [vmem:[%s172 + $0x1c8] sm:$0xff] %vm680, %v653
      %739 = vst.msk [vmem:[%s172 + $0x1d0] sm:$0xff] %vm680, %v658
      %740 = vst.msk [vmem:[%s172 + $0x1d8] sm:$0xff] %vm680, %v661
      %741 = vst.msk [vmem:[%s172 + $0x1e0] sm:$0xff] %vm680, %v666
      %742 = vst.msk [vmem:[%s172 + $0x1e8] sm:$0xff] %vm680, %v669
      %743 = vst.msk [vmem:[%s172 + $0x1f0] sm:$0xff] %vm680, %v674
      %744 = vst.msk [vmem:[%s172 + $0x1f8] sm:$0xff] %vm680, %v677
      %s745 = smul.u32 64, %s14
      %p746 = scmp.lt.s32.totalorder %s745, 255
      %s747 = scalar_select %p746, %s745, 255
      %s748 = smul.addr %s747, 8
      %s749 = scalar_lea.vmem %s3, %s748
      // Predicated region
      $region33: #{tpu_custom_call.1} parent=31 // pred_check
        %p750 = pneg %p100
      $region34: #{tpu_custom_call.1} parent=31 // pred_check_branch
        %752 = sbr.rel (%p750) target = $region36
      $region35: #{tpu_custom_call.1} parent=31 // pred_region
        %s753 = smul.u32 64, %s14
      $region36: #{tpu_custom_call.1} parent=31 // pred_fallthru
        _
    $region32: #{tpu_custom_call.1} parent=5 // pred_fallthru
      _
    %p754 = scmp.le.s32.totalorder 2, %s9
    // Predicated region
    $region37: #{tpu_custom_call.1} parent=5 // pred_check
      %p755 = pneg %p754
    $region38: #{tpu_custom_call.1} parent=5 // pred_check_branch
      %757 = sbr.rel (%p755) target = $region40
    $region39: #{tpu_custom_call.1} parent=5 // pred_region
      %s758 = ssub.s32 %s9, 2
      // Predicated region
      $region41: #{tpu_custom_call.1} parent=39 // pred_check
        %p759 = pneg %p106
      $region42: #{tpu_custom_call.1} parent=39 // pred_check_branch
        %761 = sbr.rel (%p759) target = $region44
      $region43: #{tpu_custom_call.1} parent=39 // pred_region
        %s762 = smul.u32 64, %s15
        %p763 = scmp.lt.s32.totalorder %s762, 255
        %s764 = scalar_select %p763, %s762, 255
        %s765 = smul.addr %s764, 8
        %s766 = scalar_lea.vmem %s3, %s765
      $region44: #{tpu_custom_call.1} parent=39 // pred_fallthru
        _
    $region40: #{tpu_custom_call.1} parent=5 // pred_fallthru
      _
  $region6: #{tpu_custom_call.1} parent=0 // loop_footer
    %s13 = sadd.s32 1, %s9
  $region7: #{tpu_custom_call.1} parent=0 // loop_footer_branch
    %8 = sbr.rel target = $region3
  $region8: #{tpu_custom_call.1} parent=0 // loop_exit
    _

</llo_original>
